<compile_context>
chip_gen: v5e
topology: v5e:2x2
jax: 0.10.0
libtpu: 0.0.40
codegen_flags: <defaults>
</compile_context>

<pallas_src>
import functools

import jax
import jax.numpy as jnp
from jax import lax
from jax.experimental import pallas as pl
from jax.experimental.pallas import tpu as pltpu


def _round_up(x, m):
    return ((x + m - 1) // m) * m


def _volume_render_kernel(tri_ref, dist_ref, depth_ref, color_ref, out_ref,
                          *, alpha, beta, n_pts):
    del beta  # `temp` is unused inside sdf_to_density, exactly as in the reference.
    P = n_pts

    d = jnp.abs(dist_ref[...].astype(jnp.float32))      # (TR, P) |signed distance|
    depth = depth_ref[...]                               # (TR, P) f32 sample depths

    # sdf_to_density: s*exp(-s*x)/(1+exp(-s*x))^2 is even in x, so use |x|
    # (overflow-free: e <= 1).  Divide replaced by approx EUP reciprocal.
    e = jnp.exp(-alpha * d)
    one_pe = 1.0 + e
    density = (alpha * e) * pl.reciprocal(one_pe * one_pe, approx=True)

    # deltas[j] = depth[j+1] - depth[j]; last delta = 1e10 (as in the reference).
    next_depth = pltpu.roll(depth, shift=P - 1, axis=1)   # depth[(j+1) % P]
    lane = lax.broadcasted_iota(jnp.int32, depth.shape, 1)
    deltas = jnp.where(lane == P - 1, 1.0e10, next_depth - depth)

    sigma = density * deltas                              # (TR, P)

    # Inclusive cumsum via (k <= j) triangular matmul on the MXU (tri is resident).
    cum_incl = jnp.dot(sigma, tri_ref[...], preferred_element_type=jnp.float32)
    T_incl = jnp.exp(-cum_incl)                           # exp(-sum_{k<=j} sigma_k)
    # Exclusive transmittance is the inclusive one shifted right by one lane,
    # with column 0 set to 1.  weights = T_excl - T_incl (exact telescoping of
    # T * (1 - exp(-sigma)), one exp per element here instead of two).
    T_excl = pltpu.roll(T_incl, shift=1, axis=1)
    T_excl = jnp.where(lane == 0, 1.0, T_excl)
    weights = T_excl - T_incl                             # (TR, P)

    # Aggregate: out[i, c] = sum_j weights[i, j] * color[c, i, j]
    out_ref[:, 0:1] = jnp.sum(weights * color_ref[0], axis=-1, keepdims=True)
    out_ref[:, 1:2] = jnp.sum(weights * color_ref[1], axis=-1, keepdims=True)
    out_ref[:, 2:3] = jnp.sum(weights * color_ref[2], axis=-1, keepdims=True)


class VolumeSDFRendererPallas:
    """Pallas TPU port of VolumeSDFRenderer (chunk loop -> Pallas grid)."""

    def __init__(self, chunk_size, alpha, beta, white_background=False,
                 ray_tile=1024, feature_dtype=jnp.bfloat16):
        # chunk_size kept for API parity with the reference; the Pallas grid tile
        # (ray_tile) replaces the Python chunk loop for performance.
        self._chunk_size = int(chunk_size)
        # TODO(synk): white_background is stored but never applied, matching the
        # reference forward (which never uses it).
        self._white_background = white_background
        self.alpha = float(alpha)
        self.beta = float(beta)
        self._ray_tile = int(ray_tile)
        self._feature_dtype = feature_dtype   # bf16 halves HBM bytes for dist/color

    def __call__(self, sampler, implicit_fn, ray_bundle):
        # TODO(synk): sampler / implicit_fn are external nn.Modules in the
        # reference; they are modeled as plain-JAX callables (glue).
        bundle = sampler(ray_bundle)
        sample_points = bundle["sample_points"]        # (B, n_pts, 3)
        sample_lengths = bundle["sample_lengths"]      # (B, n_pts, 1)
        B, n_pts, _ = sample_points.shape

        distance, color = implicit_fn(sample_points)
        depth_values = sample_lengths[..., 0].astype(jnp.float32)   # (B, n_pts)

        # Prefer implicit_fn emitting channel-major (3, B, n_pts) color directly
        # so no full-array transpose HLO is materialized in the wrapper.
        if color.ndim == 3 and color.shape[0] == 3 and color.shape[1] == B:
            color_cm = color
        else:
            # TODO(synk): fold this transpose into implicit_fn's epilogue to
            # avoid an extra HBM read+write of the largest input.
            color_cm = jnp.transpose(color, (2, 0, 1))

        fdt = self._feature_dtype
        distance = distance.astype(fdt)
        color_cm = color_cm.astype(fdt)

        # Tile selection: biggest tile that makes sense for B (cap at ray_tile),
        # multiple of 8; pad rays and slice the result back.  Padded rows use
        # zeros, which is numerically safe (no NaN/Inf) and discarded anyway.
        tr = min(self._ray_tile, _round_up(B, 8))
        B_pad = _round_up(B, tr)
        if B_pad != B:
            pad = B_pad - B
            distance = jnp.pad(distance, ((0, pad), (0, 0)))
            depth_values = jnp.pad(depth_values, ((0, pad), (0, 0)))
            color_cm = jnp.pad(color_cm, ((0, 0), (0, pad), (0, 0)))
        grid = (B_pad // tr,)

        # Inclusive-cumsum matrix tri[k, j] = 1 iff k <= j; constant index_map
        # keeps it resident in VMEM across all grid steps (fetched once).
        row = lax.broadcasted_iota(jnp.int32, (n_pts, n_pts), 0)
        col = lax.broadcasted_iota(jnp.int32, (n_pts, n_pts), 1)
        tri = (row <= col).astype(jnp.float32)

        kernel = functools.partial(
            _volume_render_kernel, alpha=self.alpha, beta=self.beta, n_pts=n_pts)

        out = pl.pallas_call(
            kernel,
            out_shape=jax.ShapeDtypeStruct((B_pad, 3), jnp.float32),
            grid=grid,
            in_specs=[
                pl.BlockSpec((n_pts, n_pts), lambda i: (0, 0)),     # tri (resident)
                pl.BlockSpec((tr, n_pts), lambda i: (i, 0)),        # distance (bf16)
                pl.BlockSpec((tr, n_pts), lambda i: (i, 0)),        # depth (f32)
                pl.BlockSpec((3, tr, n_pts), lambda i: (0, i, 0)),  # color channel-major
            ],
            out_specs=pl.BlockSpec((tr, 3), lambda i: (i, 0)),      # single output slab
            compiler_params=pltpu.CompilerParams(
                dimension_semantics=("parallel",),        # shards across TCs on v7x
                vmem_limit_bytes=48 * 1024 * 1024),       # headroom for large tiles
        )(tri, distance, depth_values, color_cm)

        return {"color": out[:B]}                                   # (B, 3)


def _reference_forward(distance, color, depth_values, alpha):
    """Pure-JAX mirror of the PyTorch math (cumprod path) for validation."""
    e = jnp.exp(-alpha * distance)
    density = alpha * e / (1.0 + e) ** 2
    deltas = jnp.concatenate(
        [depth_values[:, 1:] - depth_values[:, :-1],
         1.0e10 * jnp.ones_like(depth_values[:, :1])], axis=-1)
    a = jnp.exp(-density * deltas)
    T = jnp.concatenate([jnp.ones_like(a[:, :1]), a[:, :-1]], axis=1)
    T = jnp.cumprod(T, axis=1)
    weights = T * (1.0 - a)
    return jnp.sum(weights[..., None] * color, axis=1)


if __name__ == "__main__":
    key = jax.random.PRNGKey(0)
    B, n_pts = 400, 128         # rays, samples per ray
    chunk_size = 400            # cfg.chunk_size (API parity only)
    alpha, beta = 10.0, 0.05    # cfg.alpha, cfg.beta

    k_o, k_d, k_t = jax.random.split(key, 3)
    origins = 0.1 * jax.random.normal(k_o, (B, 3), jnp.float32)
    directions = jax.random.normal(k_d, (B, 3), jnp.float32)
    directions = directions / jnp.linalg.norm(directions, axis=-1, keepdims=True)
    ray_bundle = {"origins": origins, "directions": directions}

    def sampler(bundle):
        # stratified-ish depths along each ray with small deterministic jitter
        t = jnp.linspace(0.5, 4.0, n_pts, dtype=jnp.float32)
        jitter = 0.01 * jax.random.uniform(k_t, (B, n_pts), jnp.float32)
        depths = jnp.broadcast_to(t, (B, n_pts)) + jitter
        pts = (bundle["origins"][:, None, :]
               + bundle["directions"][:, None, :] * depths[..., None])
        return dict(bundle, sample_points=pts, sample_lengths=depths[..., None])

    def implicit_fn(points):
        # unit-sphere SDF + procedural color (stand-in for a neural implicit field);
        # emits color channel-major (3, B, n_pts) so the wrapper does no transpose.
        dist = jnp.linalg.norm(points, axis=-1) - 1.0          # (B, n_pts)
        col = 0.5 * (jnp.sin(3.0 * points) + 1.0)              # (B, n_pts, 3)
        return dist, jnp.moveaxis(col, -1, 0)                  # (3, B, n_pts)

    # Small ray_tile here only to exercise the multi-step grid + row-padding path
    # at demo scale; the production default is ray_tile=1024.
    renderer = VolumeSDFRendererPallas(chunk_size=chunk_size, alpha=alpha, beta=beta,
                                       ray_tile=128, feature_dtype=jnp.bfloat16)
    out = renderer(sampler, implicit_fn, ray_bundle)
    color_out = jax.block_until_ready(out["color"])

    # Validate against the pure-JAX reference of the PyTorch forward, fed the same
    # bf16-quantized distance/color so the comparison isolates the kernel math.
    bundle = sampler(ray_bundle)
    dist_raw, col_cm = implicit_fn(bundle["sample_points"])
    dist_q = dist_raw.astype(jnp.bfloat16).astype(jnp.float32)
    col_q = jnp.moveaxis(col_cm.astype(jnp.bfloat16).astype(jnp.float32), 0, -1)
    ref = _reference_forward(dist_q, col_q, bundle["sample_lengths"][..., 0], alpha)

    assert color_out.shape == (B, 3)
    max_err = float(jnp.max(jnp.abs(color_out - ref)))
    assert jnp.allclose(color_out, ref, rtol=5e-3, atol=5e-3), max_err
    print("KERNEL_OK")
</pallas_src>

<mosaic_0001>
module attributes {stable_mosaic.version = 11 : i64} {
  func.func @_volume_render_kernel(%arg0: i32, %arg1: memref<128x128xf32, #tpu.memory_space<vmem>>, %arg2: memref<128x128xbf16, #tpu.memory_space<vmem>>, %arg3: memref<128x128xf32, #tpu.memory_space<vmem>>, %arg4: memref<3x128x128xbf16, #tpu.memory_space<vmem>>, %arg5: memref<128x3xf32, #tpu.memory_space<vmem>>) attributes {dimension_semantics = [#tpu.dimension_semantics<parallel>], iteration_bounds = array<i64: 4>, scalar_prefetch = 0 : i64, scratch_operands = 0 : i64, tpu.core_type = #tpu.core_type<tc>, window_params = [{pipeline_mode = #tpu.pipeline_mode<synchronous>, transform_indices = @transform_0, window_bounds = array<i64: 128, 128>}, {transform_indices = @transform_1, window_bounds = array<i64: 128, 128>}, {transform_indices = @transform_2, window_bounds = array<i64: 128, 128>}, {transform_indices = @transform_3, window_bounds = array<i64: 3, 128, 128>}, {transform_indices = @transform_4, window_bounds = array<i64: 128, 3>}]} {
    %c0 = arith.constant 0 : index
    %c0_0 = arith.constant 0 : index
    %0 = vector.load %arg2[%c0, %c0_0] : memref<128x128xbf16, #tpu.memory_space<vmem>>, vector<128x128xbf16>
    %1 = arith.extf %0 : vector<128x128xbf16> to vector<128x128xf32>
    %2 = math.absf %1 : vector<128x128xf32>
    %c0_1 = arith.constant 0 : index
    %c0_2 = arith.constant 0 : index
    %3 = vector.load %arg3[%c0_1, %c0_2] : memref<128x128xf32, #tpu.memory_space<vmem>>, vector<128x128xf32>
    %cst = arith.constant -1.000000e+01 : f32
    %4 = vector.broadcast %cst : f32 to vector<128x128xf32>
    %5 = arith.mulf %4, %2 : vector<128x128xf32>
    %6 = math.exp %5 : vector<128x128xf32>
    %cst_3 = arith.constant 1.000000e+00 : f32
    %7 = vector.broadcast %cst_3 : f32 to vector<128x128xf32>
    %8 = arith.addf %7, %6 : vector<128x128xf32>
    %cst_4 = arith.constant 1.000000e+01 : f32
    %9 = vector.broadcast %cst_4 : f32 to vector<128x128xf32>
    %10 = arith.mulf %9, %6 : vector<128x128xf32>
    %11 = arith.mulf %8, %8 : vector<128x128xf32>
    %12 = tpu.reciprocal %11 {approx = true} : vector<128x128xf32> -> vector<128x128xf32>
    %13 = arith.mulf %10, %12 : vector<128x128xf32>
    %c127_i32 = arith.constant 127 : i32
    %14 = tpu.dynamic_rotate %3 by %c127_i32 dim 1 : vector<128x128xf32>, i32 -> vector<128x128xf32>
    %15 = tpu.iota {dimensions = array<i32: 1>} : vector<128x128xi32>
    %c127_i32_5 = arith.constant 127 : i32
    %16 = vector.broadcast %c127_i32_5 : i32 to vector<128x128xi32>
    %17 = arith.cmpi eq, %15, %16 : vector<128x128xi32>
    %18 = arith.subf %14, %3 : vector<128x128xf32>
    %cst_6 = arith.constant 1.000000e+10 : f32
    %19 = vector.broadcast %cst_6 : f32 to vector<128x128xf32>
    %20 = arith.select %17, %19, %18 : vector<128x128xi1>, vector<128x128xf32>
    %21 = arith.mulf %13, %20 : vector<128x128xf32>
    %c0_7 = arith.constant 0 : index
    %c0_8 = arith.constant 0 : index
    %22 = vector.load %arg1[%c0_7, %c0_8] : memref<128x128xf32, #tpu.memory_space<vmem>>, vector<128x128xf32>
    %cst_9 = arith.constant dense<0.000000e+00> : vector<128x128xf32>
    %23 = tpu.matmul %21, %22, %cst_9 {dimension_numbers = #tpu.dot_dimension_numbers<[1], [0], [0], [1], [0, 0, 1, 1], [], []>} : vector<128x128xf32>, vector<128x128xf32>, vector<128x128xf32> -> vector<128x128xf32>
    %cst_10 = arith.constant 0.000000e+00 : f32
    %24 = vector.broadcast %cst_10 : f32 to vector<128x128xf32>
    %25 = arith.subf %24, %23 : vector<128x128xf32>
    %26 = math.exp %25 : vector<128x128xf32>
    %c1_i32 = arith.constant 1 : i32
    %27 = tpu.dynamic_rotate %26 by %c1_i32 dim 1 : vector<128x128xf32>, i32 -> vector<128x128xf32>
    %c0_i32 = arith.constant 0 : i32
    %28 = vector.broadcast %c0_i32 : i32 to vector<128x128xi32>
    %29 = arith.cmpi eq, %15, %28 : vector<128x128xi32>
    %cst_11 = arith.constant 1.000000e+00 : f32
    %30 = vector.broadcast %cst_11 : f32 to vector<128x128xf32>
    %31 = arith.select %29, %30, %27 : vector<128x128xi1>, vector<128x128xf32>
    %32 = arith.subf %31, %26 : vector<128x128xf32>
    %c0_12 = arith.constant 0 : index
    %c0_13 = arith.constant 0 : index
    %c0_14 = arith.constant 0 : index
    %33 = vector.load %arg4[%c0_12, %c0_13, %c0_14] : memref<3x128x128xbf16, #tpu.memory_space<vmem>>, vector<1x128x128xbf16>
    %34 = vector.shape_cast %33 : vector<1x128x128xbf16> to vector<128x128xbf16>
    %35 = arith.extf %34 : vector<128x128xbf16> to vector<128x128xf32>
    %36 = arith.mulf %32, %35 : vector<128x128xf32>
    %cst_15 = arith.constant dense<0.000000e+00> : vector<128xf32>
    %37 = vector.multi_reduction <add>, %36, %cst_15 [1] : vector<128x128xf32> to vector<128xf32>
    %38 = vector.shape_cast %37 : vector<128xf32> to vector<128x1xf32>
    %c0_16 = arith.constant 0 : index
    %c0_17 = arith.constant 0 : index
    %39 = vector.load %arg5[%c0_16, %c0_17] : memref<128x3xf32, #tpu.memory_space<vmem>>, vector<128x1xf32>
    tpu.vector_store %arg5[%c0_16, %c0_17], %38 {strides = array<i32>} : memref<128x3xf32, #tpu.memory_space<vmem>>, vector<128x1xf32>,
    %c1 = arith.constant 1 : index
    %c0_18 = arith.constant 0 : index
    %c0_19 = arith.constant 0 : index
    %40 = vector.load %arg4[%c1, %c0_18, %c0_19] : memref<3x128x128xbf16, #tpu.memory_space<vmem>>, vector<1x128x128xbf16>
    %41 = vector.shape_cast %40 : vector<1x128x128xbf16> to vector<128x128xbf16>
    %42 = arith.extf %41 : vector<128x128xbf16> to vector<128x128xf32>
    %43 = arith.mulf %32, %42 : vector<128x128xf32>
    %cst_20 = arith.constant dense<0.000000e+00> : vector<128xf32>
    %44 = vector.multi_reduction <add>, %43, %cst_20 [1] : vector<128x128xf32> to vector<128xf32>
    %45 = vector.shape_cast %44 : vector<128xf32> to vector<128x1xf32>
    %c0_21 = arith.constant 0 : index
    %c1_22 = arith.constant 1 : index
    %46 = vector.load %arg5[%c0_21, %c1_22] : memref<128x3xf32, #tpu.memory_space<vmem>>, vector<128x1xf32>
    tpu.vector_store %arg5[%c0_21, %c1_22], %45 {strides = array<i32>} : memref<128x3xf32, #tpu.memory_space<vmem>>, vector<128x1xf32>,
    %c2 = arith.constant 2 : index
    %c0_23 = arith.constant 0 : index
    %c0_24 = arith.constant 0 : index
    %47 = vector.load %arg4[%c2, %c0_23, %c0_24] : memref<3x128x128xbf16, #tpu.memory_space<vmem>>, vector<1x128x128xbf16>
    %48 = vector.shape_cast %47 : vector<1x128x128xbf16> to vector<128x128xbf16>
    %49 = arith.extf %48 : vector<128x128xbf16> to vector<128x128xf32>
    %50 = arith.mulf %32, %49 : vector<128x128xf32>
    %cst_25 = arith.constant dense<0.000000e+00> : vector<128xf32>
    %51 = vector.multi_reduction <add>, %50, %cst_25 [1] : vector<128x128xf32> to vector<128xf32>
    %52 = vector.shape_cast %51 : vector<128xf32> to vector<128x1xf32>
    %c0_26 = arith.constant 0 : index
    %c2_27 = arith.constant 2 : index
    %53 = vector.load %arg5[%c0_26, %c2_27] : memref<128x3xf32, #tpu.memory_space<vmem>>, vector<128x1xf32>
    tpu.vector_store %arg5[%c0_26, %c2_27], %52 {strides = array<i32>} : memref<128x3xf32, #tpu.memory_space<vmem>>, vector<128x1xf32>,
    return
  }
  func.func @transform_0(%arg0: i32) -> (i32, i32) {
    %c0_i32 = arith.constant 0 : i32
    %c0_i32_0 = arith.constant 0 : i32
    %c0_i32_1 = arith.constant 0 : i32
    return %c0_i32, %c0_i32_0 : i32, i32
  }
  func.func @transform_1(%arg0: i32) -> (i32, i32) {
    %c0_i32 = arith.constant 0 : i32
    %c0_i32_0 = arith.constant 0 : i32
    return %arg0, %c0_i32 : i32, i32
  }
  func.func @transform_2(%arg0: i32) -> (i32, i32) {
    %c0_i32 = arith.constant 0 : i32
    %c0_i32_0 = arith.constant 0 : i32
    return %arg0, %c0_i32 : i32, i32
  }
  func.func @transform_3(%arg0: i32) -> (i32, i32, i32) {
    %c0_i32 = arith.constant 0 : i32
    %c0_i32_0 = arith.constant 0 : i32
    %c0_i32_1 = arith.constant 0 : i32
    return %c0_i32, %arg0, %c0_i32_0 : i32, i32, i32
  }
  func.func @transform_4(%arg0: i32) -> (i32, i32) {
    %c0_i32 = arith.constant 0 : i32
    %c0_i32_0 = arith.constant 0 : i32
    return %arg0, %c0_i32 : i32, i32
  }
}

</mosaic_0001>

<llo_original>
// kernel: tpu_custom_call.1
$region0: #{tpu_custom_call.1}
  #allocation0 [shape = 'u32[]', space=smem, size = 0x4, offset = 0x4, fixed_abs, tag = 'smem constant byte address 0x4 - core index']
  #allocation1 [shape = 'u32[72,128]{1,0:T(1,128)}', space=vmem, size = 0x9000, scoped, tag = 'internal scratch']
  #allocation9 [shape = 's32[]', space=sflag, size = 0x4, offset = 0, fixed_abs, tag = 'sflag constant byte address 0x0 - dummy sync flag']
  %s0 = inlined_call_operand.hbm [shape: f32[128,128], index: 0, kind: input, shape index: {}]
  %s1 = inlined_call_operand.hbm [shape: bf16[512,128], index: 1, kind: input, shape index: {}]
  %s2 = inlined_call_operand.hbm [shape: f32[512,128], index: 2, kind: input, shape index: {}]
  %s3 = inlined_call_operand.hbm [shape: bf16[3,512,128], index: 3, kind: input, shape index: {}]
  %s4 = inlined_call_operand.vmem [shape: f32[512,3], index: 4, kind: output, shape index: {}]
  %s5 = sld [smem:[#allocation0]]
  $region65: #{tpu_custom_call.1} parent=0
    _
  %s7 = ssub.s32 1, %s5
  %s8 = scalar_select 0, %s7, %s5
  $region1: #{tpu_custom_call.1} parent=0
    #allocation2 [shape = 'u8[65536]{0}', space=vmem, size = 0x10000, scoped, tag = 'input window, operand 0, single buffered']
    #allocation3 [shape = 's32[2]{0}', space=sflag, size = 0x8, scoped, tag = 'scoped memory for tpu_custom_call.1']
    #allocation4 [shape = 'u8[65536]{0}', space=vmem, size = 0x10000, scoped, tag = 'input window, operand 1']
    #allocation5 [shape = 's32[2]{0}', space=sflag, size = 0x8, scoped, tag = 'scoped memory for tpu_custom_call.1']
    #allocation6 [shape = 'u8[131072]{0}', space=vmem, size = 0x20000, scoped, tag = 'input window, operand 2']
    #allocation7 [shape = 'u8[196608]{0}', space=vmem, size = 0x30000, scoped, tag = 'input window, operand 3']
    #allocation8 [shape = 's32[2]{0}', space=sflag, size = 0x8, scoped, tag = 'scoped memory for tpu_custom_call.1']
    %9 = vsyncpa [#allocation3], 0
    %10 = vsyncpa [#allocation5], 0
    %s11 = scalar_lea.sflag [#allocation5], 1
    %12 = vsyncpa %s11, 0
    %13 = vsyncpa [#allocation8], 0
    %s14 = scalar_lea.sflag [#allocation8], 1
    %15 = vsyncpa %s14, 0
    loop: start=0, step=1, limit=6
    $region2: #{tpu_custom_call.1} parent=1 // loop_pre_header
      _
    $region3: #{tpu_custom_call.1} parent=1 // loop_header
      %s17 = sphi 0, %s21
      %p18 = scmp.ge.s32.totalorder %s17, 6
      %s25 = sphi 0, %s25
      %s27 = sphi 0, %s25
      %s28 = sphi 0, %s27
      %s42 = sphi 0, %s28
      %s48 = sphi 0, %s50
      %s51 = sphi 0, %s48
      %s52 = sphi 0, %s51
      %s68 = sphi 0, %s52
      %s74 = sphi 0, %s76
      %s77 = sphi 0, %s74
      %s78 = sphi 0, %s77
      %s94 = sphi 0, %s78
      %s100 = sphi 0, %s102
      %s103 = sphi 0, %s100
      %s104 = sphi 0, %s103
      %s120 = sphi 0, %s104
      %s126 = sphi 0, %s128
      %s129 = sphi 0, %s126
      %s130 = sphi 0, %s129
      %s146 = sphi 0, %s130
    $region4: #{tpu_custom_call.1} parent=1 // loop_header_branch
      %20 = sbr.rel (%p18) target = $region8
    $region5: #{tpu_custom_call.1} parent=1 // loop_body
      %s22 = ssub.s32 %s17, 1
      %s23 = ssub.s32 %s17, 2
      %s24 = sadd.s32 %s17, 1
      %s26 = sadd.s32 %s25, 1
      %p29 = scmp.eq.s32.totalorder %s17, 3
      %p30 = scmp.ne.s32.totalorder %s25, %s27
      %p31 = scmp.eq.s32.totalorder %s17, 0
      %p32 = por %p30, %p31
      %p33 = scmp.ne.s32.totalorder %s25, %s27
      %p34 = scmp.eq.s32.totalorder %s22, 3
      %p35 = por %p33, %p34
      %p36 = scmp.ne.s32.totalorder %s27, %s28
      %p37 = scmp.eq.s32.totalorder %s22, 0
      %p38 = por %p36, %p37
      %p39 = scmp.ne.s32.totalorder %s27, %s28
      %p40 = scmp.eq.s32.totalorder %s23, 3
      %p41 = por %p39, %p40
      %p43 = scmp.ne.s32.totalorder %s28, %s42
      %p44 = scmp.eq.s32.totalorder %s23, 0
      %p45 = por %p43, %p44
      %s46 = ssub.s32 %s17, %s24
      %p47 = scmp.eq.s32.totalorder %s46, 0
      %s49 = sadd.s32 %s48, 1
      %s50 = scalar_select %p47, %s48, %s49
      %p53 = pneg %p47
      %p54 = scmp.eq.s32.totalorder %s17, 3
      %p55 = por %p53, %p54
      %p56 = scmp.ne.s32.totalorder %s48, %s51
      %p57 = scmp.eq.s32.totalorder %s17, 0
      %p58 = por %p56, %p57
      %p59 = scmp.ne.s32.totalorder %s48, %s51
      %p60 = scmp.eq.s32.totalorder %s22, 3
      %p61 = por %p59, %p60
      %p62 = scmp.ne.s32.totalorder %s51, %s52
      %p63 = scmp.eq.s32.totalorder %s22, 0
      %p64 = por %p62, %p63
      %p65 = scmp.ne.s32.totalorder %s51, %s52
      %p66 = scmp.eq.s32.totalorder %s23, 3
      %p67 = por %p65, %p66
      %p69 = scmp.ne.s32.totalorder %s52, %s68
      %p70 = scmp.eq.s32.totalorder %s23, 0
      %p71 = por %p69, %p70
      %s72 = ssub.s32 %s17, %s24
      %p73 = scmp.eq.s32.totalorder %s72, 0
      %s75 = sadd.s32 %s74, 1
      %s76 = scalar_select %p73, %s74, %s75
      %p79 = pneg %p73
      %p80 = scmp.eq.s32.totalorder %s17, 3
      %p81 = por %p79, %p80
      %p82 = scmp.ne.s32.totalorder %s74, %s77
      %p83 = scmp.eq.s32.totalorder %s17, 0
      %p84 = por %p82, %p83
      %p85 = scmp.ne.s32.totalorder %s74, %s77
      %p86 = scmp.eq.s32.totalorder %s22, 3
      %p87 = por %p85, %p86
      %p88 = scmp.ne.s32.totalorder %s77, %s78
      %p89 = scmp.eq.s32.totalorder %s22, 0
      %p90 = por %p88, %p89
      %p91 = scmp.ne.s32.totalorder %s77, %s78
      %p92 = scmp.eq.s32.totalorder %s23, 3
      %p93 = por %p91, %p92
      %p95 = scmp.ne.s32.totalorder %s78, %s94
      %p96 = scmp.eq.s32.totalorder %s23, 0
      %p97 = por %p95, %p96
      %s98 = ssub.s32 %s17, %s24
      %p99 = scmp.eq.s32.totalorder %s98, 0
      %s101 = sadd.s32 %s100, 1
      %s102 = scalar_select %p99, %s100, %s101
      %p105 = pneg %p99
      %p106 = scmp.eq.s32.totalorder %s17, 3
      %p107 = por %p105, %p106
      %p108 = scmp.ne.s32.totalorder %s100, %s103
      %p109 = scmp.eq.s32.totalorder %s17, 0
      %p110 = por %p108, %p109
      %p111 = scmp.ne.s32.totalorder %s100, %s103
      %p112 = scmp.eq.s32.totalorder %s22, 3
      %p113 = por %p111, %p112
      %p114 = scmp.ne.s32.totalorder %s103, %s104
      %p115 = scmp.eq.s32.totalorder %s22, 0
      %p116 = por %p114, %p115
      %p117 = scmp.ne.s32.totalorder %s103, %s104
      %p118 = scmp.eq.s32.totalorder %s23, 3
      %p119 = por %p117, %p118
      %p121 = scmp.ne.s32.totalorder %s104, %s120
      %p122 = scmp.eq.s32.totalorder %s23, 0
      %p123 = por %p121, %p122
      %s124 = ssub.s32 %s17, %s24
      %p125 = scmp.eq.s32.totalorder %s124, 0
      %s127 = sadd.s32 %s126, 1
      %s128 = scalar_select %p125, %s126, %s127
      %p131 = pneg %p125
      %p132 = scmp.eq.s32.totalorder %s17, 3
      %p133 = por %p131, %p132
      %p134 = scmp.ne.s32.totalorder %s126, %s129
      %p135 = scmp.eq.s32.totalorder %s17, 0
      %p136 = por %p134, %p135
      %p137 = scmp.ne.s32.totalorder %s126, %s129
      %p138 = scmp.eq.s32.totalorder %s22, 3
      %p139 = por %p137, %p138
      %p140 = scmp.ne.s32.totalorder %s129, %s130
      %p141 = scmp.eq.s32.totalorder %s22, 0
      %p142 = por %p140, %p141
      %p143 = scmp.ne.s32.totalorder %s129, %s130
      %p144 = scmp.eq.s32.totalorder %s23, 3
      %p145 = por %p143, %p144
      %p147 = scmp.ne.s32.totalorder %s130, %s146
      %p148 = scmp.eq.s32.totalorder %s23, 0
      %p149 = por %p147, %p148
      %p150 = scmp.le.s32.totalorder 1, %s17
      %p151 = scmp.lt.s32.totalorder %s17, 5
      %p152 = pnand %p150, %p151
      %p153 = pneg %p152
      // Predicated region
      $region9: #{tpu_custom_call.1} parent=5 // pred_check
        _
      $region10: #{tpu_custom_call.1} parent=5 // pred_check_branch
        %155 = sbr.rel (%p152) target = $region12
      $region11: #{tpu_custom_call.1} parent=5 // pred_region
        %s156 = ssub.s32 %s17, 1
        // Predicated region
        $region13: #{tpu_custom_call.1} parent=11 // pred_check
          %p157 = pneg %p38
        $region14: #{tpu_custom_call.1} parent=11 // pred_check_branch
          %159 = sbr.rel (%p157) target = $region16
        $region15: #{tpu_custom_call.1} parent=11 // pred_region
          %161 = vsyncadd [#allocation3], 0
          %s162 = sshll.u32 %s0, 4
          %s163 = int_to_ptr.hbm [resolvable:$true] %s162
          %s164 = sshll.u32 [#allocation2], 4
          %s165 = int_to_ptr.vmem [resolvable:$true] %s164
          %170 = dma.hbm_to_vmem [thread:$0]  %s163, 2048, %s165, [#allocation3], 128, 128, 8
        $region16: #{tpu_custom_call.1} parent=11 // pred_fallthru
          _
      $region12: #{tpu_custom_call.1} parent=5 // pred_fallthru
        _
      %p171 = scmp.lt.s32.totalorder %s17, 4
      // Predicated region
      $region17: #{tpu_custom_call.1} parent=5 // pred_check
        %p172 = pneg %p171
      $region18: #{tpu_custom_call.1} parent=5 // pred_check_branch
        %174 = sbr.rel (%p172) target = $region20
      $region19: #{tpu_custom_call.1} parent=5 // pred_region
        // Predicated region
        $region21: #{tpu_custom_call.1} parent=19 // pred_check
          %p175 = pneg %p58
        $region22: #{tpu_custom_call.1} parent=19 // pred_check_branch
          %177 = sbr.rel (%p175) target = $region24
        $region23: #{tpu_custom_call.1} parent=19 // pred_region
          %s178 = sand.u32 %s17, 1
          %s179 = scalar_lea.sflag [#allocation5], %s178
          %s180 = sand.u32 %s48, 1
          %s181 = smul.addr %s180, 64
          %s182 = scalar_lea.vmem [#allocation4], %s181
          %s183 = smul.u32 16, %s17
          %185 = vsyncadd %s179, 0
          %s186 = smul.addr %s183, 4
          %s187 = scalar_lea.hbm %s1, %s186
          %s188 = sshll.u32 %s187, 4
          %s189 = int_to_ptr.hbm [resolvable:$true] %s188
          %s190 = sshll.u32 %s182, 4
          %s191 = int_to_ptr.vmem [resolvable:$true] %s190
          %196 = dma.hbm_to_vmem [thread:$0]  %s189, 1024, %s191, %s179, 64, 64, 4
        $region24: #{tpu_custom_call.1} parent=19 // pred_fallthru
          _
        // Predicated region
        $region25: #{tpu_custom_call.1} parent=19 // pred_check
          %p197 = pneg %p84
        $region26: #{tpu_custom_call.1} parent=19 // pred_check_branch
          %199 = sbr.rel (%p197) target = $region28
        $region27: #{tpu_custom_call.1} parent=19 // pred_region
          %s200 = sand.u32 %s17, 1
          %s201 = scalar_lea.sflag [#allocation5], %s200
          %s202 = sand.u32 %s74, 1
          %s203 = smul.addr %s202, 128
          %s204 = scalar_lea.vmem [#allocation6], %s203
          %s205 = smul.u32 16, %s17
          %207 = vsyncadd %s201, 0
          %s208 = smul.addr %s205, 8
          %s209 = scalar_lea.hbm %s2, %s208
          %s210 = sshll.u32 %s209, 4
          %s211 = int_to_ptr.hbm [resolvable:$true] %s210
          %s212 = sshll.u32 %s204, 4
          %s213 = int_to_ptr.vmem [resolvable:$true] %s212
          %218 = dma.hbm_to_vmem [thread:$0]  %s211, 2048, %s213, %s201, 128, 128, 8
        $region28: #{tpu_custom_call.1} parent=19 // pred_fallthru
          _
        // Predicated region
        $region29: #{tpu_custom_call.1} parent=19 // pred_check
          %p219 = pneg %p110
        $region30: #{tpu_custom_call.1} parent=19 // pred_check_branch
          %221 = sbr.rel (%p219) target = $region32
        $region31: #{tpu_custom_call.1} parent=19 // pred_region
          #allocation10 [shape = 'u32[6]{0}', space=smem, size = 0x18, scoped, tag = 'DMA stride descriptor']
          %s222 = sand.u32 %s100, 1
          %s223 = scalar_lea.sflag [#allocation8], %s222
          %s224 = sand.u32 %s100, 1
          %s225 = smul.addr %s224, 192
          %s226 = scalar_lea.vmem [#allocation7], %s225
          %s227 = smul.u32 16, %s17
          %229 = vsyncadd %s223, 0
          %s230 = smul.addr %s227, 4
          %s231 = scalar_lea.hbm %s3, %s230
          %s233 = sshll.u32 1, 14
          %s234 = sxor.u32 4294967295, %s233
          %s236 = sld [smem:[#allocation0]]
          %s237 = sadd.s32 2, %s236
          %s239 = sshll.u32 7, 26
          %s240 = sxor.u32 4294967295, %s239
          %s241 = sand.u32 0, %s240
          %s242 = sshll.u32 %s237, 26
          %s243 = sor.u32 %s241, %s242
          %s244 = sshll.u32 %s231, 4
          %s245 = int_to_ptr.hbm [resolvable:$true] %s244
          %s246 = sshll.u32 %s226, 4
          %s247 = int_to_ptr.vmem [resolvable:$true] %s246
          %253 = sst [smem:[#allocation10]] 4096
          %s254 = scalar_lea.smem [#allocation10], 1
          %255 = sst [smem:[%s254]] 1024
          %s256 = scalar_lea.smem [#allocation10], 2
          %257 = sst [smem:[%s256]] 16
          %s258 = scalar_lea.smem [#allocation10], 3
          %259 = sst [smem:[%s258]] 64
          %s260 = scalar_lea.smem [#allocation10], 4
          %261 = sst [smem:[%s260]] 64
          %s262 = scalar_lea.smem [#allocation10], 5
          %263 = sst [smem:[%s262]] 4
          %265 = dma.general %s245, 3072, %s247, %s223, [#allocation9], [#allocation10], %s243, 0
        $region32: #{tpu_custom_call.1} parent=19 // pred_fallthru
          _
      $region20: #{tpu_custom_call.1} parent=5 // pred_fallthru
        _
      %p266 = scmp.le.s32.totalorder 1, %s17
      %p267 = scmp.lt.s32.totalorder %s17, 5
      %p268 = pnand %p266, %p267
      %p269 = pneg %p268
      // Predicated region
      $region33: #{tpu_custom_call.1} parent=5 // pred_check
        _
      $region34: #{tpu_custom_call.1} parent=5 // pred_check_branch
        %271 = sbr.rel (%p268) target = $region36
      $region35: #{tpu_custom_call.1} parent=5 // pred_region
        %s272 = ssub.s32 %s17, 1
        // Predicated region
        $region37: #{tpu_custom_call.1} parent=35 // pred_check
          %p273 = pneg %p38
        $region38: #{tpu_custom_call.1} parent=35 // pred_check_branch
          %275 = sbr.rel (%p273) target = $region40
        $region39: #{tpu_custom_call.1} parent=35 // pred_region
          %277 = dma.done [#allocation3], 2048
        $region40: #{tpu_custom_call.1} parent=35 // pred_fallthru
          _
        %s278 = sand.u32 %s22, 1
        %s279 = scalar_lea.sflag [#allocation5], %s278
        %s280 = sand.u32 %s51, 1
        %s281 = smul.addr %s280, 64
        %s282 = scalar_lea.vmem [#allocation4], %s281
        // Predicated region
        $region41: #{tpu_custom_call.1} parent=35 // pred_check
          %p283 = pneg %p64
        $region42: #{tpu_custom_call.1} parent=35 // pred_check_branch
          %285 = sbr.rel (%p283) target = $region44
        $region43: #{tpu_custom_call.1} parent=35 // pred_region
          %287 = dma.done %s279, 1024
        $region44: #{tpu_custom_call.1} parent=35 // pred_fallthru
          _
        %s288 = sand.u32 %s22, 1
        %s289 = scalar_lea.sflag [#allocation5], %s288
        %s290 = sand.u32 %s77, 1
        %s291 = smul.addr %s290, 128
        %s292 = scalar_lea.vmem [#allocation6], %s291
        // Predicated region
        $region45: #{tpu_custom_call.1} parent=35 // pred_check
          %p293 = pneg %p90
        $region46: #{tpu_custom_call.1} parent=35 // pred_check_branch
          %295 = sbr.rel (%p293) target = $region48
        $region47: #{tpu_custom_call.1} parent=35 // pred_region
          %297 = dma.done %s289, 2048
        $region48: #{tpu_custom_call.1} parent=35 // pred_fallthru
          _
        %s298 = sand.u32 %s103, 1
        %s299 = scalar_lea.sflag [#allocation8], %s298
        %s300 = sand.u32 %s103, 1
        %s301 = smul.addr %s300, 192
        %s302 = scalar_lea.vmem [#allocation7], %s301
        // Predicated region
        $region49: #{tpu_custom_call.1} parent=35 // pred_check
          %p303 = pneg %p116
        $region50: #{tpu_custom_call.1} parent=35 // pred_check_branch
          %305 = sbr.rel (%p303) target = $region52
        $region51: #{tpu_custom_call.1} parent=35 // pred_region
          %307 = dma.done %s299, 3072
        $region52: #{tpu_custom_call.1} parent=35 // pred_fallthru
          _
        %p308 = pneg %p38
        %p309 = pneg %p35
        %s310 = sand.u32 %s22, 1
        %s311 = scalar_lea.sflag [#allocation5], %s310
        %s312 = sand.u32 %s51, 1
        %s313 = smul.addr %s312, 64
        %s314 = scalar_lea.vmem [#allocation4], %s313
        %p315 = pneg %p64
        %p316 = pneg %p61
        %s317 = sand.u32 %s22, 1
        %s318 = scalar_lea.sflag [#allocation5], %s317
        %s319 = sand.u32 %s77, 1
        %s320 = smul.addr %s319, 128
        %s321 = scalar_lea.vmem [#allocation6], %s320
        %p322 = pneg %p90
        %p323 = pneg %p87
        %s324 = sand.u32 %s103, 1
        %s325 = scalar_lea.sflag [#allocation8], %s324
        %s326 = sand.u32 %s103, 1
        %s327 = smul.addr %s326, 192
        %s328 = scalar_lea.vmem [#allocation7], %s327
        %p329 = pneg %p116
        %p330 = pneg %p113
        %p331 = pneg %p142
        %p332 = pneg %p139
        %s333 = smul.u32 16, %s22
        %p334 = scmp.lt.s32.totalorder %s333, 63
        %s335 = scalar_select %p334, %s333, 63
        %s336 = smul.addr %s335, 8
        %s337 = scalar_lea.vmem %s4, %s336
        %s338 = smul.u32 16, %s22
        %s339 = smul.u32 16, %s22
        %s340 = smul.u32 16, %s22
        %s341 = smul.u32 16, %s22
        %p342 = scmp.lt.s32.totalorder %s341, 63
        %s343 = scalar_select %p342, %s341, 63
        %s344 = smul.addr %s343, 8
        %s345 = scalar_lea.vmem %s4, %s344
        %s346 = smul.u32 16, %s22
        %v347 = vld [vmem:[%s282] sm:$0xf]
        %v348 = vld [vmem:[%s282 + $0x4] sm:$0xf]
        %v349 = vld [vmem:[%s282 + $0x8] sm:$0xf]
        %v350 = vld [vmem:[%s282 + $0xc] sm:$0xf]
        %v351 = vld [vmem:[%s282 + $0x10] sm:$0xf]
        %v352 = vld [vmem:[%s282 + $0x14] sm:$0xf]
        %v353 = vld [vmem:[%s282 + $0x18] sm:$0xf]
        %v354 = vld [vmem:[%s282 + $0x1c] sm:$0xf]
        %v355 = vld [vmem:[%s282 + $0x20] sm:$0xf]
        %v356 = vld [vmem:[%s282 + $0x24] sm:$0xf]
        %v357 = vld [vmem:[%s282 + $0x28] sm:$0xf]
        %v358 = vld [vmem:[%s282 + $0x2c] sm:$0xf]
        %v359 = vld [vmem:[%s282 + $0x30] sm:$0xf]
        %v360 = vld [vmem:[%s282 + $0x34] sm:$0xf]
        %v361 = vld [vmem:[%s282 + $0x38] sm:$0xf]
        %v362 = vld [vmem:[%s282 + $0x3c] sm:$0xf]
        %v363 = vunpack.c.l.bf16 %v347
        %v364 = vunpack.c.l.bf16 %v348
        %v365 = vunpack.c.l.bf16 %v349
        %v366 = vunpack.c.l.bf16 %v350
        %v367 = vunpack.c.l.bf16 %v351
        %v368 = vunpack.c.l.bf16 %v352
        %v369 = vunpack.c.l.bf16 %v353
        %v370 = vunpack.c.l.bf16 %v354
        %v371 = vunpack.c.l.bf16 %v355
        %v372 = vunpack.c.l.bf16 %v356
        %v373 = vunpack.c.l.bf16 %v357
        %v374 = vunpack.c.l.bf16 %v358
        %v375 = vunpack.c.l.bf16 %v359
        %v376 = vunpack.c.l.bf16 %v360
        %v377 = vunpack.c.l.bf16 %v361
        %v378 = vunpack.c.l.bf16 %v362
        %v379 = vand.u32 2147483647, %v363
        %v380 = vand.u32 2147483647, %v364
        %v381 = vand.u32 2147483647, %v365
        %v382 = vand.u32 2147483647, %v366
        %v383 = vand.u32 2147483647, %v367
        %v384 = vand.u32 2147483647, %v368
        %v385 = vand.u32 2147483647, %v369
        %v386 = vand.u32 2147483647, %v370
        %v387 = vand.u32 2147483647, %v371
        %v388 = vand.u32 2147483647, %v372
        %v389 = vand.u32 2147483647, %v373
        %v390 = vand.u32 2147483647, %v374
        %v391 = vand.u32 2147483647, %v375
        %v392 = vand.u32 2147483647, %v376
        %v393 = vand.u32 2147483647, %v377
        %v394 = vand.u32 2147483647, %v378
        %v395 = vld [vmem:[%s292] sm:$0xff]
        %v396 = vld [vmem:[%s292 + $0x8] sm:$0xff]
        %v397 = vld [vmem:[%s292 + $0x10] sm:$0xff]
        %v398 = vld [vmem:[%s292 + $0x18] sm:$0xff]
        %v399 = vld [vmem:[%s292 + $0x20] sm:$0xff]
        %v400 = vld [vmem:[%s292 + $0x28] sm:$0xff]
        %v401 = vld [vmem:[%s292 + $0x30] sm:$0xff]
        %v402 = vld [vmem:[%s292 + $0x38] sm:$0xff]
        %v403 = vld [vmem:[%s292 + $0x40] sm:$0xff]
        %v404 = vld [vmem:[%s292 + $0x48] sm:$0xff]
        %v405 = vld [vmem:[%s292 + $0x50] sm:$0xff]
        %v406 = vld [vmem:[%s292 + $0x58] sm:$0xff]
        %v407 = vld [vmem:[%s292 + $0x60] sm:$0xff]
        %v408 = vld [vmem:[%s292 + $0x68] sm:$0xff]
        %v409 = vld [vmem:[%s292 + $0x70] sm:$0xff]
        %v410 = vld [vmem:[%s292 + $0x78] sm:$0xff]
        %v411 = vmul.f32 %v379, -10.0
        %v412 = vmul.f32 %v380, -10.0
        %v413 = vmul.f32 %v381, -10.0
        %v414 = vmul.f32 %v382, -10.0
        %v415 = vmul.f32 %v383, -10.0
        %v416 = vmul.f32 %v384, -10.0
        %v417 = vmul.f32 %v385, -10.0
        %v418 = vmul.f32 %v386, -10.0
        %v419 = vmul.f32 %v387, -10.0
        %v420 = vmul.f32 %v388, -10.0
        %v421 = vmul.f32 %v389, -10.0
        %v422 = vmul.f32 %v390, -10.0
        %v423 = vmul.f32 %v391, -10.0
        %v424 = vmul.f32 %v392, -10.0
        %v425 = vmul.f32 %v393, -10.0
        %v426 = vmul.f32 %v394, -10.0
        %v427 = vmul.f32 %v411, 1.442695
        %v428 = vpow.pop %v427
        %v429 = vmul.f32 %v412, 1.442695
        %v430 = vpow.pop %v429
        %v431 = vmul.f32 %v413, 1.442695
        %v432 = vpow.pop %v431
        %v433 = vmul.f32 %v414, 1.442695
        %v434 = vpow.pop %v433
        %v435 = vmul.f32 %v415, 1.442695
        %v436 = vpow.pop %v435
        %v437 = vmul.f32 %v416, 1.442695
        %v438 = vpow.pop %v437
        %v439 = vmul.f32 %v417, 1.442695
        %v440 = vpow.pop %v439
        %v441 = vmul.f32 %v418, 1.442695
        %v442 = vpow.pop %v441
        %v443 = vmul.f32 %v419, 1.442695
        %v444 = vpow.pop %v443
        %v445 = vmul.f32 %v420, 1.442695
        %v446 = vpow.pop %v445
        %v447 = vmul.f32 %v421, 1.442695
        %v448 = vpow.pop %v447
        %v449 = vmul.f32 %v422, 1.442695
        %v450 = vpow.pop %v449
        %v451 = vmul.f32 %v423, 1.442695
        %v452 = vpow.pop %v451
        %v453 = vmul.f32 %v424, 1.442695
        %v454 = vpow.pop %v453
        %v455 = vmul.f32 %v425, 1.442695
        %v456 = vpow.pop %v455
        %v457 = vmul.f32 %v426, 1.442695
        %v458 = vpow.pop %v457
        %v459 = vadd.f32 %v428, 1.0
        %v460 = vadd.f32 %v430, 1.0
        %v461 = vadd.f32 %v432, 1.0
        %v462 = vadd.f32 %v434, 1.0
        %v463 = vadd.f32 %v436, 1.0
        %v464 = vadd.f32 %v438, 1.0
        %v465 = vadd.f32 %v440, 1.0
        %v466 = vadd.f32 %v442, 1.0
        %v467 = vadd.f32 %v444, 1.0
        %v468 = vadd.f32 %v446, 1.0
        %v469 = vadd.f32 %v448, 1.0
        %v470 = vadd.f32 %v450, 1.0
        %v471 = vadd.f32 %v452, 1.0
        %v472 = vadd.f32 %v454, 1.0
        %v473 = vadd.f32 %v456, 1.0
        %v474 = vadd.f32 %v458, 1.0
        %v475 = vmul.f32 %v428, 10.0
        %v476 = vmul.f32 %v430, 10.0
        %v477 = vmul.f32 %v432, 10.0
        %v478 = vmul.f32 %v434, 10.0
        %v479 = vmul.f32 %v436, 10.0
        %v480 = vmul.f32 %v438, 10.0
        %v481 = vmul.f32 %v440, 10.0
        %v482 = vmul.f32 %v442, 10.0
        %v483 = vmul.f32 %v444, 10.0
        %v484 = vmul.f32 %v446, 10.0
        %v485 = vmul.f32 %v448, 10.0
        %v486 = vmul.f32 %v450, 10.0
        %v487 = vmul.f32 %v452, 10.0
        %v488 = vmul.f32 %v454, 10.0
        %v489 = vmul.f32 %v456, 10.0
        %v490 = vmul.f32 %v458, 10.0
        %v491 = vmul.f32 %v459, %v459
        %v492 = vmul.f32 %v460, %v460
        %v493 = vmul.f32 %v461, %v461
        %v494 = vmul.f32 %v462, %v462
        %v495 = vmul.f32 %v463, %v463
        %v496 = vmul.f32 %v464, %v464
        %v497 = vmul.f32 %v465, %v465
        %v498 = vmul.f32 %v466, %v466
        %v499 = vmul.f32 %v467, %v467
        %v500 = vmul.f32 %v468, %v468
        %v501 = vmul.f32 %v469, %v469
        %v502 = vmul.f32 %v470, %v470
        %v503 = vmul.f32 %v471, %v471
        %v504 = vmul.f32 %v472, %v472
        %v505 = vmul.f32 %v473, %v473
        %v506 = vmul.f32 %v474, %v474
        %v507 = vrcp.pop %v491
        %v508 = vrcp.pop %v492
        %v509 = vrcp.pop %v493
        %v510 = vrcp.pop %v494
        %v511 = vrcp.pop %v495
        %v512 = vrcp.pop %v496
        %v513 = vrcp.pop %v497
        %v514 = vrcp.pop %v498
        %v515 = vrcp.pop %v499
        %v516 = vrcp.pop %v500
        %v517 = vrcp.pop %v501
        %v518 = vrcp.pop %v502
        %v519 = vrcp.pop %v503
        %v520 = vrcp.pop %v504
        %v521 = vrcp.pop %v505
        %v522 = vrcp.pop %v506
        %v523 = vmul.f32 %v475, %v507
        %v524 = vmul.f32 %v476, %v508
        %v525 = vmul.f32 %v477, %v509
        %v526 = vmul.f32 %v478, %v510
        %v527 = vmul.f32 %v479, %v511
        %v528 = vmul.f32 %v480, %v512
        %v529 = vmul.f32 %v481, %v513
        %v530 = vmul.f32 %v482, %v514
        %v531 = vmul.f32 %v483, %v515
        %v532 = vmul.f32 %v484, %v516
        %v533 = vmul.f32 %v485, %v517
        %v534 = vmul.f32 %v486, %v518
        %v535 = vmul.f32 %v487, %v519
        %v536 = vmul.f32 %v488, %v520
        %v537 = vmul.f32 %v489, %v521
        %v538 = vmul.f32 %v490, %v522
        %539 = vrot.lane.b32.xlu0 %v395, 127
        %v540 = vpop.permute.xlu0 %539
        %541 = vrot.lane.b32.xlu0 %v396, 127
        %v542 = vpop.permute.xlu0 %541
        %543 = vrot.lane.b32.xlu0 %v397, 127
        %v544 = vpop.permute.xlu0 %543
        %545 = vrot.lane.b32.xlu0 %v398, 127
        %v546 = vpop.permute.xlu0 %545
        %547 = vrot.lane.b32.xlu0 %v399, 127
        %v548 = vpop.permute.xlu0 %547
        %549 = vrot.lane.b32.xlu0 %v400, 127
        %v550 = vpop.permute.xlu0 %549
        %551 = vrot.lane.b32.xlu0 %v401, 127
        %v552 = vpop.permute.xlu0 %551
        %553 = vrot.lane.b32.xlu0 %v402, 127
        %v554 = vpop.permute.xlu0 %553
        %555 = vrot.lane.b32.xlu0 %v403, 127
        %v556 = vpop.permute.xlu0 %555
        %557 = vrot.lane.b32.xlu0 %v404, 127
        %v558 = vpop.permute.xlu0 %557
        %559 = vrot.lane.b32.xlu0 %v405, 127
        %v560 = vpop.permute.xlu0 %559
        %561 = vrot.lane.b32.xlu0 %v406, 127
        %v562 = vpop.permute.xlu0 %561
        %563 = vrot.lane.b32.xlu0 %v407, 127
        %v564 = vpop.permute.xlu0 %563
        %565 = vrot.lane.b32.xlu0 %v408, 127
        %v566 = vpop.permute.xlu0 %565
        %567 = vrot.lane.b32.xlu0 %v409, 127
        %v568 = vpop.permute.xlu0 %567
        %569 = vrot.lane.b32.xlu0 %v410, 127
        %v570 = vpop.permute.xlu0 %569
        %v571 = vlaneseq
        %v572 = vand.u32 %v571, 127
        %vm573 = vcmp.eq.s32.totalorder %v572, 127
        %v574 = vsub.f32 %v540, %v395
        %v575 = vsub.f32 %v542, %v396
        %v576 = vsub.f32 %v544, %v397
        %v577 = vsub.f32 %v546, %v398
        %v578 = vsub.f32 %v548, %v399
        %v579 = vsub.f32 %v550, %v400
        %v580 = vsub.f32 %v552, %v401
        %v581 = vsub.f32 %v554, %v402
        %v582 = vsub.f32 %v556, %v403
        %v583 = vsub.f32 %v558, %v404
        %v584 = vsub.f32 %v560, %v405
        %v585 = vsub.f32 %v562, %v406
        %v586 = vsub.f32 %v564, %v407
        %v587 = vsub.f32 %v566, %v408
        %v588 = vsub.f32 %v568, %v409
        %v589 = vsub.f32 %v570, %v410
        %v590 = vsel %vm573, 1e+10, %v574
        %v591 = vsel %vm573, 1e+10, %v575
        %v592 = vsel %vm573, 1e+10, %v576
        %v593 = vsel %vm573, 1e+10, %v577
        %v594 = vsel %vm573, 1e+10, %v578
        %v595 = vsel %vm573, 1e+10, %v579
        %v596 = vsel %vm573, 1e+10, %v580
        %v597 = vsel %vm573, 1e+10, %v581
        %v598 = vsel %vm573, 1e+10, %v582
        %v599 = vsel %vm573, 1e+10, %v583
        %v600 = vsel %vm573, 1e+10, %v584
        %v601 = vsel %vm573, 1e+10, %v585
        %v602 = vsel %vm573, 1e+10, %v586
        %v603 = vsel %vm573, 1e+10, %v587
        %v604 = vsel %vm573, 1e+10, %v588
        %v605 = vsel %vm573, 1e+10, %v589
        %v606 = vmul.f32 %v523, %v590
        %v607 = vmul.f32 %v524, %v591
        %v608 = vmul.f32 %v525, %v592
        %v609 = vmul.f32 %v526, %v593
        %v610 = vmul.f32 %v527, %v594
        %v611 = vmul.f32 %v528, %v595
        %v612 = vmul.f32 %v529, %v596
        %v613 = vmul.f32 %v530, %v597
        %v614 = vmul.f32 %v531, %v598
        %v615 = vmul.f32 %v532, %v599
        %v616 = vmul.f32 %v533, %v600
        %v617 = vmul.f32 %v534, %v601
        %v618 = vmul.f32 %v535, %v602
        %v619 = vmul.f32 %v536, %v603
        %v620 = vmul.f32 %v537, %v604
        %v621 = vmul.f32 %v538, %v605
        %v622 = vld [vmem:[#allocation2] sm:$0xff]
        %v623 = vld [vmem:[#allocation2 + $0x8] sm:$0xff]
        %v624 = vld [vmem:[#allocation2 + $0x10] sm:$0xff]
        %v625 = vld [vmem:[#allocation2 + $0x18] sm:$0xff]
        %v626 = vld [vmem:[#allocation2 + $0x20] sm:$0xff]
        %v627 = vld [vmem:[#allocation2 + $0x28] sm:$0xff]
        %v628 = vld [vmem:[#allocation2 + $0x30] sm:$0xff]
        %v629 = vld [vmem:[#allocation2 + $0x38] sm:$0xff]
        %v630 = vld [vmem:[#allocation2 + $0x40] sm:$0xff]
        %v631 = vld [vmem:[#allocation2 + $0x48] sm:$0xff]
        %v632 = vld [vmem:[#allocation2 + $0x50] sm:$0xff]
        %v633 = vld [vmem:[#allocation2 + $0x58] sm:$0xff]
        %v634 = vld [vmem:[#allocation2 + $0x60] sm:$0xff]
        %v635 = vld [vmem:[#allocation2 + $0x68] sm:$0xff]
        %v636 = vld [vmem:[#allocation2 + $0x70] sm:$0xff]
        %v637 = vld [vmem:[#allocation2 + $0x78] sm:$0xff]
        %638 = vmatpush.msra.mxu0 %v637
        %639 = vmatpush.msra.mxu0 %v636
        %640 = vmatpush.msra.mxu0 %v635
        %641 = vmatpush.msra.mxu0 %v634
        %642 = vmatpush.msra.mxu0 %v633
        %643 = vmatpush.msra.mxu0 %v632
        %644 = vmatpush.msra.mxu0 %v631
        %645 = vmatpush.msra.mxu0 %v630
        %646 = vmatpush.msra.mxu0 %v629
        %647 = vmatpush.msra.mxu0 %v628
        %648 = vmatpush.msra.mxu0 %v627
        %649 = vmatpush.msra.mxu0 %v626
        %650 = vmatpush.msra.mxu0 %v625
        %651 = vmatpush.msra.mxu0 %v624
        %652 = vmatpush.msra.mxu0 %v623
        %653 = vmatpush.msra.mxu0 %v622
        %654 = vmatmul.f32.gmra.mxu0 %v606
        %v655 = vpop.f32.mrf.mxu0
        %v656 = vadd.f32 0.0, %v655
        %657 = vmatmul.f32.gmra.mxu0 %v607
        %v658 = vpop.f32.mrf.mxu0
        %v659 = vadd.f32 0.0, %v658
        %660 = vmatmul.f32.gmra.mxu0 %v608
        %v661 = vpop.f32.mrf.mxu0
        %v662 = vadd.f32 0.0, %v661
        %663 = vmatmul.f32.gmra.mxu0 %v609
        %v664 = vpop.f32.mrf.mxu0
        %v665 = vadd.f32 0.0, %v664
        %666 = vmatmul.f32.gmra.mxu0 %v610
        %v667 = vpop.f32.mrf.mxu0
        %v668 = vadd.f32 0.0, %v667
        %669 = vmatmul.f32.gmra.mxu0 %v611
        %v670 = vpop.f32.mrf.mxu0
        %v671 = vadd.f32 0.0, %v670
        %672 = vmatmul.f32.gmra.mxu0 %v612
        %v673 = vpop.f32.mrf.mxu0
        %v674 = vadd.f32 0.0, %v673
        %675 = vmatmul.f32.gmra.mxu0 %v613
        %v676 = vpop.f32.mrf.mxu0
        %v677 = vadd.f32 0.0, %v676
        %678 = vmatmul.f32.gmra.mxu0 %v614
        %v679 = vpop.f32.mrf.mxu0
        %v680 = vadd.f32 0.0, %v679
        %681 = vmatmul.f32.gmra.mxu0 %v615
        %v682 = vpop.f32.mrf.mxu0
        %v683 = vadd.f32 0.0, %v682
        %684 = vmatmul.f32.gmra.mxu0 %v616
        %v685 = vpop.f32.mrf.mxu0
        %v686 = vadd.f32 0.0, %v685
        %687 = vmatmul.f32.gmra.mxu0 %v617
        %v688 = vpop.f32.mrf.mxu0
        %v689 = vadd.f32 0.0, %v688
        %690 = vmatmul.f32.gmra.mxu0 %v618
        %v691 = vpop.f32.mrf.mxu0
        %v692 = vadd.f32 0.0, %v691
        %693 = vmatmul.f32.gmra.mxu0 %v619
        %v694 = vpop.f32.mrf.mxu0
        %v695 = vadd.f32 0.0, %v694
        %696 = vmatmul.f32.gmra.mxu0 %v620
        %v697 = vpop.f32.mrf.mxu0
        %v698 = vadd.f32 0.0, %v697
        %699 = vmatmul.f32.gmra.mxu0 %v621
        %v700 = vpop.f32.mrf.mxu0
        %v701 = vadd.f32 0.0, %v700
        %702 = vdwg.mxu0
        %v703 = vsub.f32 0.0, %v656
        %v704 = vsub.f32 0.0, %v659
        %v705 = vsub.f32 0.0, %v662
        %v706 = vsub.f32 0.0, %v665
        %v707 = vsub.f32 0.0, %v668
        %v708 = vsub.f32 0.0, %v671
        %v709 = vsub.f32 0.0, %v674
        %v710 = vsub.f32 0.0, %v677
        %v711 = vsub.f32 0.0, %v680
        %v712 = vsub.f32 0.0, %v683
        %v713 = vsub.f32 0.0, %v686
        %v714 = vsub.f32 0.0, %v689
        %v715 = vsub.f32 0.0, %v692
        %v716 = vsub.f32 0.0, %v695
        %v717 = vsub.f32 0.0, %v698
        %v718 = vsub.f32 0.0, %v701
        %v719 = vmul.f32 %v703, 1.442695
        %v720 = vpow.pop %v719
        %v721 = vmul.f32 %v704, 1.442695
        %v722 = vpow.pop %v721
        %v723 = vmul.f32 %v705, 1.442695
        %v724 = vpow.pop %v723
        %v725 = vmul.f32 %v706, 1.442695
        %v726 = vpow.pop %v725
        %v727 = vmul.f32 %v707, 1.442695
        %v728 = vpow.pop %v727
        %v729 = vmul.f32 %v708, 1.442695
        %v730 = vpow.pop %v729
        %v731 = vmul.f32 %v709, 1.442695
        %v732 = vpow.pop %v731
        %v733 = vmul.f32 %v710, 1.442695
        %v734 = vpow.pop %v733
        %v735 = vmul.f32 %v711, 1.442695
        %v736 = vpow.pop %v735
        %v737 = vmul.f32 %v712, 1.442695
        %v738 = vpow.pop %v737
        %v739 = vmul.f32 %v713, 1.442695
        %v740 = vpow.pop %v739
        %v741 = vmul.f32 %v714, 1.442695
        %v742 = vpow.pop %v741
        %v743 = vmul.f32 %v715, 1.442695
        %v744 = vpow.pop %v743
        %v745 = vmul.f32 %v716, 1.442695
        %v746 = vpow.pop %v745
        %v747 = vmul.f32 %v717, 1.442695
        %v748 = vpow.pop %v747
        %v749 = vmul.f32 %v718, 1.442695
        %v750 = vpow.pop %v749
        %751 = vrot.lane.b32.xlu0 %v720, 1
        %v752 = vpop.permute.xlu0 %751
        %753 = vrot.lane.b32.xlu0 %v722, 1
        %v754 = vpop.permute.xlu0 %753
        %755 = vrot.lane.b32.xlu0 %v724, 1
        %v756 = vpop.permute.xlu0 %755
        %757 = vrot.lane.b32.xlu0 %v726, 1
        %v758 = vpop.permute.xlu0 %757
        %759 = vrot.lane.b32.xlu0 %v728, 1
        %v760 = vpop.permute.xlu0 %759
        %761 = vrot.lane.b32.xlu0 %v730, 1
        %v762 = vpop.permute.xlu0 %761
        %763 = vrot.lane.b32.xlu0 %v732, 1
        %v764 = vpop.permute.xlu0 %763
        %765 = vrot.lane.b32.xlu0 %v734, 1
        %v766 = vpop.permute.xlu0 %765
        %767 = vrot.lane.b32.xlu0 %v736, 1
        %v768 = vpop.permute.xlu0 %767
        %769 = vrot.lane.b32.xlu0 %v738, 1
        %v770 = vpop.permute.xlu0 %769
        %771 = vrot.lane.b32.xlu0 %v740, 1
        %v772 = vpop.permute.xlu0 %771
        %773 = vrot.lane.b32.xlu0 %v742, 1
        %v774 = vpop.permute.xlu0 %773
        %775 = vrot.lane.b32.xlu0 %v744, 1
        %v776 = vpop.permute.xlu0 %775
        %777 = vrot.lane.b32.xlu0 %v746, 1
        %v778 = vpop.permute.xlu0 %777
        %779 = vrot.lane.b32.xlu0 %v748, 1
        %v780 = vpop.permute.xlu0 %779
        %781 = vrot.lane.b32.xlu0 %v750, 1
        %v782 = vpop.permute.xlu0 %781
        %vm783 = vcmp.eq.s32.totalorder %v572, 0
        %v784 = vsel %vm783, 1.0, %v752
        %v785 = vsel %vm783, 1.0, %v754
        %v786 = vsel %vm783, 1.0, %v756
        %v787 = vsel %vm783, 1.0, %v758
        %v788 = vsel %vm783, 1.0, %v760
        %v789 = vsel %vm783, 1.0, %v762
        %v790 = vsel %vm783, 1.0, %v764
        %v791 = vsel %vm783, 1.0, %v766
        %v792 = vsel %vm783, 1.0, %v768
        %v793 = vsel %vm783, 1.0, %v770
        %v794 = vsel %vm783, 1.0, %v772
        %v795 = vsel %vm783, 1.0, %v774
        %v796 = vsel %vm783, 1.0, %v776
        %v797 = vsel %vm783, 1.0, %v778
        %v798 = vsel %vm783, 1.0, %v780
        %v799 = vsel %vm783, 1.0, %v782
        %v800 = vsub.f32 %v784, %v720
        %v801 = vsub.f32 %v785, %v722
        %v802 = vsub.f32 %v786, %v724
        %v803 = vsub.f32 %v787, %v726
        %v804 = vsub.f32 %v788, %v728
        %v805 = vsub.f32 %v789, %v730
        %v806 = vsub.f32 %v790, %v732
        %v807 = vsub.f32 %v791, %v734
        %v808 = vsub.f32 %v792, %v736
        %v809 = vsub.f32 %v793, %v738
        %v810 = vsub.f32 %v794, %v740
        %v811 = vsub.f32 %v795, %v742
        %v812 = vsub.f32 %v796, %v744
        %v813 = vsub.f32 %v797, %v746
        %v814 = vsub.f32 %v798, %v748
        %v815 = vsub.f32 %v799, %v750
        %v816 = vld [vmem:[%s302] sm:$0xf]
        %v817 = vld [vmem:[%s302 + $0x4] sm:$0xf]
        %v818 = vld [vmem:[%s302 + $0x8] sm:$0xf]
        %v819 = vld [vmem:[%s302 + $0xc] sm:$0xf]
        %v820 = vld [vmem:[%s302 + $0x10] sm:$0xf]
        %v821 = vld [vmem:[%s302 + $0x14] sm:$0xf]
        %v822 = vld [vmem:[%s302 + $0x18] sm:$0xf]
        %v823 = vld [vmem:[%s302 + $0x1c] sm:$0xf]
        %v824 = vld [vmem:[%s302 + $0x20] sm:$0xf]
        %v825 = vld [vmem:[%s302 + $0x24] sm:$0xf]
        %v826 = vld [vmem:[%s302 + $0x28] sm:$0xf]
        %v827 = vld [vmem:[%s302 + $0x2c] sm:$0xf]
        %v828 = vld [vmem:[%s302 + $0x30] sm:$0xf]
        %v829 = vld [vmem:[%s302 + $0x34] sm:$0xf]
        %v830 = vld [vmem:[%s302 + $0x38] sm:$0xf]
        %v831 = vld [vmem:[%s302 + $0x3c] sm:$0xf]
        %v832 = vunpack.c.l.bf16 %v816
        %v833 = vunpack.c.l.bf16 %v817
        %v834 = vunpack.c.l.bf16 %v818
        %v835 = vunpack.c.l.bf16 %v819
        %v836 = vunpack.c.l.bf16 %v820
        %v837 = vunpack.c.l.bf16 %v821
        %v838 = vunpack.c.l.bf16 %v822
        %v839 = vunpack.c.l.bf16 %v823
        %v840 = vunpack.c.l.bf16 %v824
        %v841 = vunpack.c.l.bf16 %v825
        %v842 = vunpack.c.l.bf16 %v826
        %v843 = vunpack.c.l.bf16 %v827
        %v844 = vunpack.c.l.bf16 %v828
        %v845 = vunpack.c.l.bf16 %v829
        %v846 = vunpack.c.l.bf16 %v830
        %v847 = vunpack.c.l.bf16 %v831
        %v848 = vmul.f32 %v800, %v832
        %v849 = vmul.f32 %v801, %v833
        %v850 = vmul.f32 %v802, %v834
        %v851 = vmul.f32 %v803, %v835
        %v852 = vmul.f32 %v804, %v836
        %v853 = vmul.f32 %v805, %v837
        %v854 = vmul.f32 %v806, %v838
        %v855 = vmul.f32 %v807, %v839
        %v856 = vmul.f32 %v808, %v840
        %v857 = vmul.f32 %v809, %v841
        %v858 = vmul.f32 %v810, %v842
        %v859 = vmul.f32 %v811, %v843
        %v860 = vmul.f32 %v812, %v844
        %v861 = vmul.f32 %v813, %v845
        %v862 = vmul.f32 %v814, %v846
        %v863 = vmul.f32 %v815, %v847
        %864 = vadd.xlane.f32.xlu0 %v848
        %v865 = vpop.xlane.xlu0 %864
        %866 = vadd.xlane.f32.xlu0 %v849
        %v867 = vpop.xlane.xlu0 %866
        %868 = vadd.xlane.f32.xlu0 %v850
        %v869 = vpop.xlane.xlu0 %868
        %870 = vadd.xlane.f32.xlu0 %v851
        %v871 = vpop.xlane.xlu0 %870
        %872 = vadd.xlane.f32.xlu0 %v852
        %v873 = vpop.xlane.xlu0 %872
        %874 = vadd.xlane.f32.xlu0 %v853
        %v875 = vpop.xlane.xlu0 %874
        %876 = vadd.xlane.f32.xlu0 %v854
        %v877 = vpop.xlane.xlu0 %876
        %878 = vadd.xlane.f32.xlu0 %v855
        %v879 = vpop.xlane.xlu0 %878
        %880 = vadd.xlane.f32.xlu0 %v856
        %v881 = vpop.xlane.xlu0 %880
        %882 = vadd.xlane.f32.xlu0 %v857
        %v883 = vpop.xlane.xlu0 %882
        %884 = vadd.xlane.f32.xlu0 %v858
        %v885 = vpop.xlane.xlu0 %884
        %886 = vadd.xlane.f32.xlu0 %v859
        %v887 = vpop.xlane.xlu0 %886
        %888 = vadd.xlane.f32.xlu0 %v860
        %v889 = vpop.xlane.xlu0 %888
        %890 = vadd.xlane.f32.xlu0 %v861
        %v891 = vpop.xlane.xlu0 %890
        %892 = vadd.xlane.f32.xlu0 %v862
        %v893 = vpop.xlane.xlu0 %892
        %894 = vadd.xlane.f32.xlu0 %v863
        %v895 = vpop.xlane.xlu0 %894
        %vm896 = vcmask 7168
        %897 = vst.msk [vmem:[%s345] sm:$0xff] %vm896, %v865
        %898 = vst.msk [vmem:[%s345 + $0x8] sm:$0xff] %vm896, %v867
        %899 = vst.msk [vmem:[%s345 + $0x10] sm:$0xff] %vm896, %v869
        %900 = vst.msk [vmem:[%s345 + $0x18] sm:$0xff] %vm896, %v871
        %901 = vst.msk [vmem:[%s345 + $0x20] sm:$0xff] %vm896, %v873
        %902 = vst.msk [vmem:[%s345 + $0x28] sm:$0xff] %vm896, %v875
        %903 = vst.msk [vmem:[%s345 + $0x30] sm:$0xff] %vm896, %v877
        %904 = vst.msk [vmem:[%s345 + $0x38] sm:$0xff] %vm896, %v879
        %905 = vst.msk [vmem:[%s345 + $0x40] sm:$0xff] %vm896, %v881
        %906 = vst.msk [vmem:[%s345 + $0x48] sm:$0xff] %vm896, %v883
        %907 = vst.msk [vmem:[%s345 + $0x50] sm:$0xff] %vm896, %v885
        %908 = vst.msk [vmem:[%s345 + $0x58] sm:$0xff] %vm896, %v887
        %909 = vst.msk [vmem:[%s345 + $0x60] sm:$0xff] %vm896, %v889
        %910 = vst.msk [vmem:[%s345 + $0x68] sm:$0xff] %vm896, %v891
        %911 = vst.msk [vmem:[%s345 + $0x70] sm:$0xff] %vm896, %v893
        %912 = vst.msk [vmem:[%s345 + $0x78] sm:$0xff] %vm896, %v895
        %s913 = scalar_lea.vmem %s302, 64 [#allocation7]
        %v914 = vld [vmem:[%s913] sm:$0xf]
        %v915 = vld [vmem:[%s913 + $0x4] sm:$0xf]
        %v916 = vld [vmem:[%s913 + $0x8] sm:$0xf]
        %v917 = vld [vmem:[%s913 + $0xc] sm:$0xf]
        %v918 = vld [vmem:[%s913 + $0x10] sm:$0xf]
        %v919 = vld [vmem:[%s913 + $0x14] sm:$0xf]
        %v920 = vld [vmem:[%s913 + $0x18] sm:$0xf]
        %v921 = vld [vmem:[%s913 + $0x1c] sm:$0xf]
        %v922 = vld [vmem:[%s913 + $0x20] sm:$0xf]
        %v923 = vld [vmem:[%s913 + $0x24] sm:$0xf]
        %v924 = vld [vmem:[%s913 + $0x28] sm:$0xf]
        %v925 = vld [vmem:[%s913 + $0x2c] sm:$0xf]
        %v926 = vld [vmem:[%s913 + $0x30] sm:$0xf]
        %v927 = vld [vmem:[%s913 + $0x34] sm:$0xf]
        %v928 = vld [vmem:[%s913 + $0x38] sm:$0xf]
        %v929 = vld [vmem:[%s913 + $0x3c] sm:$0xf]
        %v930 = vunpack.c.l.bf16 %v914
        %v931 = vunpack.c.l.bf16 %v915
        %v932 = vunpack.c.l.bf16 %v916
        %v933 = vunpack.c.l.bf16 %v917
        %v934 = vunpack.c.l.bf16 %v918
        %v935 = vunpack.c.l.bf16 %v919
        %v936 = vunpack.c.l.bf16 %v920
        %v937 = vunpack.c.l.bf16 %v921
        %v938 = vunpack.c.l.bf16 %v922
        %v939 = vunpack.c.l.bf16 %v923
        %v940 = vunpack.c.l.bf16 %v924
        %v941 = vunpack.c.l.bf16 %v925
        %v942 = vunpack.c.l.bf16 %v926
        %v943 = vunpack.c.l.bf16 %v927
        %v944 = vunpack.c.l.bf16 %v928
        %v945 = vunpack.c.l.bf16 %v929
        %v946 = vmul.f32 %v800, %v930
        %v947 = vmul.f32 %v801, %v931
        %v948 = vmul.f32 %v802, %v932
        %v949 = vmul.f32 %v803, %v933
        %v950 = vmul.f32 %v804, %v934
        %v951 = vmul.f32 %v805, %v935
        %v952 = vmul.f32 %v806, %v936
        %v953 = vmul.f32 %v807, %v937
        %v954 = vmul.f32 %v808, %v938
        %v955 = vmul.f32 %v809, %v939
        %v956 = vmul.f32 %v810, %v940
        %v957 = vmul.f32 %v811, %v941
        %v958 = vmul.f32 %v812, %v942
        %v959 = vmul.f32 %v813, %v943
        %v960 = vmul.f32 %v814, %v944
        %v961 = vmul.f32 %v815, %v945
        %962 = vadd.xlane.f32.xlu0 %v946
        %v963 = vpop.xlane.xlu0 %962
        %964 = vadd.xlane.f32.xlu0 %v947
        %v965 = vpop.xlane.xlu0 %964
        %966 = vadd.xlane.f32.xlu0 %v948
        %v967 = vpop.xlane.xlu0 %966
        %968 = vadd.xlane.f32.xlu0 %v949
        %v969 = vpop.xlane.xlu0 %968
        %970 = vadd.xlane.f32.xlu0 %v950
        %v971 = vpop.xlane.xlu0 %970
        %972 = vadd.xlane.f32.xlu0 %v951
        %v973 = vpop.xlane.xlu0 %972
        %974 = vadd.xlane.f32.xlu0 %v952
        %v975 = vpop.xlane.xlu0 %974
        %976 = vadd.xlane.f32.xlu0 %v953
        %v977 = vpop.xlane.xlu0 %976
        %978 = vadd.xlane.f32.xlu0 %v954
        %v979 = vpop.xlane.xlu0 %978
        %980 = vadd.xlane.f32.xlu0 %v955
        %v981 = vpop.xlane.xlu0 %980
        %982 = vadd.xlane.f32.xlu0 %v956
        %v983 = vpop.xlane.xlu0 %982
        %984 = vadd.xlane.f32.xlu0 %v957
        %v985 = vpop.xlane.xlu0 %984
        %986 = vadd.xlane.f32.xlu0 %v958
        %v987 = vpop.xlane.xlu0 %986
        %988 = vadd.xlane.f32.xlu0 %v959
        %v989 = vpop.xlane.xlu0 %988
        %990 = vadd.xlane.f32.xlu0 %v960
        %v991 = vpop.xlane.xlu0 %990
        %992 = vadd.xlane.f32.xlu0 %v961
        %v993 = vpop.xlane.xlu0 %992
        %vm994 = vcmask 15368
        %995 = vst.msk [vmem:[%s345] sm:$0xff] %vm994, %v963
        %996 = vst.msk [vmem:[%s345 + $0x8] sm:$0xff] %vm994, %v965
        %997 = vst.msk [vmem:[%s345 + $0x10] sm:$0xff] %vm994, %v967
        %998 = vst.msk [vmem:[%s345 + $0x18] sm:$0xff] %vm994, %v969
        %999 = vst.msk [vmem:[%s345 + $0x20] sm:$0xff] %vm994, %v971
        %1000 = vst.msk [vmem:[%s345 + $0x28] sm:$0xff] %vm994, %v973
        %1001 = vst.msk [vmem:[%s345 + $0x30] sm:$0xff] %vm994, %v975
        %1002 = vst.msk [vmem:[%s345 + $0x38] sm:$0xff] %vm994, %v977
        %1003 = vst.msk [vmem:[%s345 + $0x40] sm:$0xff] %vm994, %v979
        %1004 = vst.msk [vmem:[%s345 + $0x48] sm:$0xff] %vm994, %v981
        %1005 = vst.msk [vmem:[%s345 + $0x50] sm:$0xff] %vm994, %v983
        %1006 = vst.msk [vmem:[%s345 + $0x58] sm:$0xff] %vm994, %v985
        %1007 = vst.msk [vmem:[%s345 + $0x60] sm:$0xff] %vm994, %v987
        %1008 = vst.msk [vmem:[%s345 + $0x68] sm:$0xff] %vm994, %v989
        %1009 = vst.msk [vmem:[%s345 + $0x70] sm:$0xff] %vm994, %v991
        %1010 = vst.msk [vmem:[%s345 + $0x78] sm:$0xff] %vm994, %v993
        %s1011 = scalar_lea.vmem %s302, 128 [#allocation7]
        %v1012 = vld [vmem:[%s1011] sm:$0xf]
        %v1013 = vld [vmem:[%s1011 + $0x4] sm:$0xf]
        %v1014 = vld [vmem:[%s1011 + $0x8] sm:$0xf]
        %v1015 = vld [vmem:[%s1011 + $0xc] sm:$0xf]
        %v1016 = vld [vmem:[%s1011 + $0x10] sm:$0xf]
        %v1017 = vld [vmem:[%s1011 + $0x14] sm:$0xf]
        %v1018 = vld [vmem:[%s1011 + $0x18] sm:$0xf]
        %v1019 = vld [vmem:[%s1011 + $0x1c] sm:$0xf]
        %v1020 = vld [vmem:[%s1011 + $0x20] sm:$0xf]
        %v1021 = vld [vmem:[%s1011 + $0x24] sm:$0xf]
        %v1022 = vld [vmem:[%s1011 + $0x28] sm:$0xf]
        %v1023 = vld [vmem:[%s1011 + $0x2c] sm:$0xf]
        %v1024 = vld [vmem:[%s1011 + $0x30] sm:$0xf]
        %v1025 = vld [vmem:[%s1011 + $0x34] sm:$0xf]
        %v1026 = vld [vmem:[%s1011 + $0x38] sm:$0xf]
        %v1027 = vld [vmem:[%s1011 + $0x3c] sm:$0xf]
        %v1028 = vunpack.c.l.bf16 %v1012
        %v1029 = vunpack.c.l.bf16 %v1013
        %v1030 = vunpack.c.l.bf16 %v1014
        %v1031 = vunpack.c.l.bf16 %v1015
        %v1032 = vunpack.c.l.bf16 %v1016
        %v1033 = vunpack.c.l.bf16 %v1017
        %v1034 = vunpack.c.l.bf16 %v1018
        %v1035 = vunpack.c.l.bf16 %v1019
        %v1036 = vunpack.c.l.bf16 %v1020
        %v1037 = vunpack.c.l.bf16 %v1021
        %v1038 = vunpack.c.l.bf16 %v1022
        %v1039 = vunpack.c.l.bf16 %v1023
        %v1040 = vunpack.c.l.bf16 %v1024
        %v1041 = vunpack.c.l.bf16 %v1025
        %v1042 = vunpack.c.l.bf16 %v1026
        %v1043 = vunpack.c.l.bf16 %v1027
        %v1044 = vmul.f32 %v800, %v1028
        %v1045 = vmul.f32 %v801, %v1029
        %v1046 = vmul.f32 %v802, %v1030
        %v1047 = vmul.f32 %v803, %v1031
        %v1048 = vmul.f32 %v804, %v1032
        %v1049 = vmul.f32 %v805, %v1033
        %v1050 = vmul.f32 %v806, %v1034
        %v1051 = vmul.f32 %v807, %v1035
        %v1052 = vmul.f32 %v808, %v1036
        %v1053 = vmul.f32 %v809, %v1037
        %v1054 = vmul.f32 %v810, %v1038
        %v1055 = vmul.f32 %v811, %v1039
        %v1056 = vmul.f32 %v812, %v1040
        %v1057 = vmul.f32 %v813, %v1041
        %v1058 = vmul.f32 %v814, %v1042
        %v1059 = vmul.f32 %v815, %v1043
        %1060 = vadd.xlane.f32.xlu0 %v1044
        %v1061 = vpop.xlane.xlu0 %1060
        %1062 = vadd.xlane.f32.xlu0 %v1045
        %v1063 = vpop.xlane.xlu0 %1062
        %1064 = vadd.xlane.f32.xlu0 %v1046
        %v1065 = vpop.xlane.xlu0 %1064
        %1066 = vadd.xlane.f32.xlu0 %v1047
        %v1067 = vpop.xlane.xlu0 %1066
        %1068 = vadd.xlane.f32.xlu0 %v1048
        %v1069 = vpop.xlane.xlu0 %1068
        %1070 = vadd.xlane.f32.xlu0 %v1049
        %v1071 = vpop.xlane.xlu0 %1070
        %1072 = vadd.xlane.f32.xlu0 %v1050
        %v1073 = vpop.xlane.xlu0 %1072
        %1074 = vadd.xlane.f32.xlu0 %v1051
        %v1075 = vpop.xlane.xlu0 %1074
        %1076 = vadd.xlane.f32.xlu0 %v1052
        %v1077 = vpop.xlane.xlu0 %1076
        %1078 = vadd.xlane.f32.xlu0 %v1053
        %v1079 = vpop.xlane.xlu0 %1078
        %1080 = vadd.xlane.f32.xlu0 %v1054
        %v1081 = vpop.xlane.xlu0 %1080
        %1082 = vadd.xlane.f32.xlu0 %v1055
        %v1083 = vpop.xlane.xlu0 %1082
        %1084 = vadd.xlane.f32.xlu0 %v1056
        %v1085 = vpop.xlane.xlu0 %1084
        %1086 = vadd.xlane.f32.xlu0 %v1057
        %v1087 = vpop.xlane.xlu0 %1086
        %1088 = vadd.xlane.f32.xlu0 %v1058
        %v1089 = vpop.xlane.xlu0 %1088
        %1090 = vadd.xlane.f32.xlu0 %v1059
        %v1091 = vpop.xlane.xlu0 %1090
        %vm1092 = vcmask 23568
        %1093 = vst.msk [vmem:[%s345] sm:$0xff] %vm1092, %v1061
        %1094 = vst.msk [vmem:[%s345 + $0x8] sm:$0xff] %vm1092, %v1063
        %1095 = vst.msk [vmem:[%s345 + $0x10] sm:$0xff] %vm1092, %v1065
        %1096 = vst.msk [vmem:[%s345 + $0x18] sm:$0xff] %vm1092, %v1067
        %1097 = vst.msk [vmem:[%s345 + $0x20] sm:$0xff] %vm1092, %v1069
        %1098 = vst.msk [vmem:[%s345 + $0x28] sm:$0xff] %vm1092, %v1071
        %1099 = vst.msk [vmem:[%s345 + $0x30] sm:$0xff] %vm1092, %v1073
        %1100 = vst.msk [vmem:[%s345 + $0x38] sm:$0xff] %vm1092, %v1075
        %1101 = vst.msk [vmem:[%s345 + $0x40] sm:$0xff] %vm1092, %v1077
        %1102 = vst.msk [vmem:[%s345 + $0x48] sm:$0xff] %vm1092, %v1079
        %1103 = vst.msk [vmem:[%s345 + $0x50] sm:$0xff] %vm1092, %v1081
        %1104 = vst.msk [vmem:[%s345 + $0x58] sm:$0xff] %vm1092, %v1083
        %1105 = vst.msk [vmem:[%s345 + $0x60] sm:$0xff] %vm1092, %v1085
        %1106 = vst.msk [vmem:[%s345 + $0x68] sm:$0xff] %vm1092, %v1087
        %1107 = vst.msk [vmem:[%s345 + $0x70] sm:$0xff] %vm1092, %v1089
        %1108 = vst.msk [vmem:[%s345 + $0x78] sm:$0xff] %vm1092, %v1091
        %s1109 = smul.u32 16, %s22
        %p1110 = scmp.lt.s32.totalorder %s1109, 63
        %s1111 = scalar_select %p1110, %s1109, 63
        %s1112 = smul.addr %s1111, 8
        %s1113 = scalar_lea.vmem %s4, %s1112
        // Predicated region
        $region53: #{tpu_custom_call.1} parent=35 // pred_check
          %p1114 = pneg %p139
        $region54: #{tpu_custom_call.1} parent=35 // pred_check_branch
          %1116 = sbr.rel (%p1114) target = $region56
        $region55: #{tpu_custom_call.1} parent=35 // pred_region
          %s1117 = smul.u32 16, %s22
        $region56: #{tpu_custom_call.1} parent=35 // pred_fallthru
          _
      $region36: #{tpu_custom_call.1} parent=5 // pred_fallthru
        _
      %p1118 = scmp.le.s32.totalorder 2, %s17
      // Predicated region
      $region57: #{tpu_custom_call.1} parent=5 // pred_check
        %p1119 = pneg %p1118
      $region58: #{tpu_custom_call.1} parent=5 // pred_check_branch
        %1121 = sbr.rel (%p1119) target = $region60
      $region59: #{tpu_custom_call.1} parent=5 // pred_region
        %s1122 = ssub.s32 %s17, 2
        // Predicated region
        $region61: #{tpu_custom_call.1} parent=59 // pred_check
          %p1123 = pneg %p145
        $region62: #{tpu_custom_call.1} parent=59 // pred_check_branch
          %1125 = sbr.rel (%p1123) target = $region64
        $region63: #{tpu_custom_call.1} parent=59 // pred_region
          %s1126 = smul.u32 16, %s23
          %p1127 = scmp.lt.s32.totalorder %s1126, 63
          %s1128 = scalar_select %p1127, %s1126, 63
          %s1129 = smul.addr %s1128, 8
          %s1130 = scalar_lea.vmem %s4, %s1129
        $region64: #{tpu_custom_call.1} parent=59 // pred_fallthru
          _
      $region60: #{tpu_custom_call.1} parent=5 // pred_fallthru
        _
    $region6: #{tpu_custom_call.1} parent=1 // loop_footer
      %s21 = sadd.s32 1, %s17
    $region7: #{tpu_custom_call.1} parent=1 // loop_footer_branch
      %16 = sbr.rel target = $region3
    $region8: #{tpu_custom_call.1} parent=1 // loop_exit
      _
    %1131 = vsyncpa [#allocation3], 1
    %s1132 = scalar_lea.sflag [#allocation3], 1
    %1133 = vsyncpa %s1132, 1
    %1134 = vsyncpa [#allocation5], 1
    %s1135 = scalar_lea.sflag [#allocation5], 1
    %1136 = vsyncpa %s1135, 1
    %1137 = vsyncpa [#allocation8], 1
    %s1138 = scalar_lea.sflag [#allocation8], 1
    %1139 = vsyncpa %s1138, 1

</llo_original>
